<compile_context>
chip_gen: v6e
topology: v6e:2x2x1
jax: 0.10.0
libtpu: 0.0.40
codegen_flags: <defaults>
</compile_context>

<pallas_src>
import math
from collections import OrderedDict

import jax
import jax.numpy as jnp
from jax.experimental import pallas as pl
from jax.experimental.pallas import tpu as pltpu

K = 3     # Conv1d kernel size
PAD = 1   # "same" padding for k=3


def fused_conv1d_relu_kernel(x_ref, w_ref, b_ref, o_ref):
    """One (section, batch-tile) grid step of same-padded Conv1d(k=3) + ReLU.

    Layout is NCL so L is the lane axis (lane-dense output stores).

    x_ref: (Bt, Cin, L)    activations for this section / batch tile
    w_ref: (K, Cout, Cin)  this section's conv taps
    b_ref: (Cout, 1)       this section's bias (f32)
    o_ref: (Bt, Cout, L)   output tile
    """
    bt, cout, L = o_ref.shape
    lane = jax.lax.broadcasted_iota(jnp.int32, (cout, L), 1)
    bias = b_ref[...].astype(jnp.float32)          # (Cout, 1) broadcasts over L

    w0 = w_ref[0]                                   # (Cout, Cin)
    w1 = w_ref[1]
    w2 = w_ref[2]

    for b in range(bt):                             # static unroll, bt <= 8
        xb = x_ref[b]                               # (Cin, L)
        # Center tap initializes the f32 accumulator (no zeros + add).
        acc = jnp.dot(w1, xb, preferred_element_type=jnp.float32)       # (Cout, L)
        # k=0 tap contributes at l+1: roll right by 1, zero the wrapped column 0
        # (this is the in-kernel "same" padding -- no HBM pad array needed).
        t0 = jnp.dot(w0, xb, preferred_element_type=jnp.float32)
        acc = acc + jnp.where(lane == 0, 0.0, pltpu.roll(t0, 1, axis=1))
        # k=2 tap contributes at l-1: roll left by 1, zero the wrapped column L-1.
        t2 = jnp.dot(w2, xb, preferred_element_type=jnp.float32)
        acc = acc + jnp.where(lane == L - 1, 0.0, pltpu.roll(t2, L - 1, axis=1))
        # Bias + ReLU in f32 (keeps the VPU path f32 -- matters on v5e), then cast.
        o_ref[b] = jnp.maximum(acc + bias, 0.0).astype(o_ref.dtype)


def fused_conv1d_relu(x, w, b, *, bt=None, vmem_limit_bytes=None):
    """Fused per-section Conv1d(k=3, same) + ReLU.

    x: (S, B, Cin, L)   NCL activations, one slab per section
    w: (S, K, Cout, Cin)
    b: (S, Cout)
    returns (S, B, Cout, L) in x.dtype
    """
    S, B, cin, L = x.shape
    _, kk, cout, _ = w.shape
    assert kk == K
    if bt is None:
        bt = min(B, 8)
        while B % bt:
            bt -= 1
    assert B % bt == 0
    b2 = b.reshape(S, cout, 1).astype(jnp.float32)

    params = dict(dimension_semantics=("parallel", "parallel"))
    if vmem_limit_bytes is not None:
        # For real VDCNN shapes (L in the thousands, C up to 512) budget VMEM
        # explicitly -- v7x has only 64 MiB (32 MiB default scoped).
        params["vmem_limit_bytes"] = vmem_limit_bytes

    return pl.pallas_call(
        fused_conv1d_relu_kernel,
        out_shape=jax.ShapeDtypeStruct((S, B, cout, L), x.dtype),
        grid=(S, B // bt),
        in_specs=[
            pl.BlockSpec((None, bt, cin, L), lambda s, i: (s, i, 0, 0)),
            pl.BlockSpec((None, kk, cout, cin), lambda s, i: (s, 0, 0, 0)),
            pl.BlockSpec((None, cout, 1), lambda s, i: (s, 0, 0)),
        ],
        out_specs=pl.BlockSpec((None, bt, cout, L), lambda s, i: (s, i, 0, 0)),
        compiler_params=pltpu.CompilerParams(**params),
    )(x, w, b2)


class Section:
    """Stand-in for a vdcnn section: Conv1d(cin, cout, k=3, pad=1) + ReLU."""

    def __init__(self, key, c_in, c_out, dtype=jnp.bfloat16):
        k_w, k_b = jax.random.split(key)
        bound = 1.0 / math.sqrt(c_in * K)   # PyTorch default uniform init
        # (K, Cout, Cin) layout so w[k] @ x is an MXU matmul with L on lanes.
        self.weight = jax.random.uniform(
            k_w, (K, c_out, c_in), jnp.float32, -bound, bound).astype(dtype)
        self.bias = jax.random.uniform(
            k_b, (c_out,), jnp.float32, -bound, bound)   # bias kept in f32
        self.device = None

    def network(self, x_ncl):
        """Single-section apply, kept for API parity with the PyTorch module."""
        y = fused_conv1d_relu(x_ncl[None], self.weight[None], self.bias[None])
        return y[0]


class LearnerModelParallelPallas:
    """JAX/Pallas equivalent of LearnerModelParallel.forward (sections fused)."""

    def __init__(self, sections):
        self.sections = sections
        self.num_sections = len(sections)
        mods = list(sections.values())
        # Weights of all sections stacked once -> one fused pallas_call per
        # forward instead of one launch per section. Requires homogeneous
        # (Cin, Cout) sections (true for this stand-in).
        self.w_stacked = jnp.stack([m.weight for m in mods])   # (S, K, Cout, Cin)
        self.b_stacked = jnp.stack([m.bias for m in mods])     # (S, Cout)
        # TODO(synk): per-GPU device placement / parallel_apply threading has no
        # Pallas equivalent; the fused "parallel" grid axis plays that role.

    def forward(self, features):
        inputs = list(features.values())[:-1]          # drop the last feature
        assert len(inputs) == self.num_sections
        # Stack to (S, B, C, L). Ideally the upstream producer emits this stacked
        # layout directly so this copy disappears.
        x = jnp.stack(inputs)
        y = fused_conv1d_relu(x, self.w_stacked, self.b_stacked)
        return OrderedDict((i + 1, y[i]) for i in range(self.num_sections))


def _reference_section(x_ncl, w, b):
    """Pure-JAX f32 reference for one section (conv1d same-pad + relu), NCL."""
    x32 = x_ncl.astype(jnp.float32)
    w32 = w.astype(jnp.float32)
    B, cin, L = x32.shape
    cout = w.shape[1]
    xp = jnp.pad(x32, ((0, 0), (0, 0), (PAD, PAD)))
    acc = jnp.zeros((B, cout, L), jnp.float32)
    for k in range(K):
        acc = acc + jnp.einsum("oc,bcl->bol", w32[k], xp[:, :, k:k + L])
    return jnp.maximum(acc + b[None, :, None].astype(jnp.float32), 0.0)


if __name__ == "__main__":
    # Small but lane-friendly shapes: L = 128 puts a full native lane row on the
    # output store; C = 8 fills the sublanes.
    B, C, L = 2, 8, 128
    num_sections = 3
    act_dtype = jnp.bfloat16   # bf16 acts/weights, f32 accumulation (v6e/v7x win)

    root = jax.random.PRNGKey(0)
    keys = jax.random.split(root, 2 * num_sections + 2)

    # sections keyed 1..num_sections (as in the PyTorch module)
    sections = OrderedDict(
        (i + 1, Section(keys[i], C, C, dtype=act_dtype))
        for i in range(num_sections))
    model = LearnerModelParallelPallas(sections)

    # features has one more entry than sections; the last one is dropped in forward
    feat_keys = keys[num_sections:2 * num_sections + 1]
    features = OrderedDict(
        (i + 1,
         jax.random.normal(feat_keys[i], (B, C, L), jnp.float32).astype(act_dtype))
        for i in range(num_sections + 1))

    outputs = model.forward(features)
    jax.block_until_ready(list(outputs.values()))

    # Correctness check vs pure-JAX f32 reference (outputs are bf16-quantized).
    inputs = list(features.values())[:-1]
    for idx, (sec_id, sec) in enumerate(sections.items()):
        ref = _reference_section(inputs[idx], sec.weight, sec.bias)
        got = outputs[idx + 1]
        assert got.shape == (B, C, L), got.shape
        assert got.dtype == act_dtype, got.dtype
        assert jnp.allclose(got.astype(jnp.float32), ref, atol=2e-2, rtol=2e-2), \
            f"mismatch in section {sec_id}"

    print("KERNEL_OK")
</pallas_src>

<mosaic_0001>
module attributes {stable_mosaic.version = 11 : i64} {
  func.func @fused_conv1d_relu_kernel(%arg0: i32, %arg1: i32, %arg2: memref<1x2x8x128xbf16, #tpu.memory_space<vmem>>, %arg3: memref<1x3x8x8xbf16, #tpu.memory_space<vmem>>, %arg4: memref<1x8x1xf32, #tpu.memory_space<vmem>>, %arg5: memref<1x2x8x128xbf16, #tpu.memory_space<vmem>>) attributes {dimension_semantics = [#tpu.dimension_semantics<parallel>, #tpu.dimension_semantics<parallel>], iteration_bounds = array<i64: 3, 1>, scalar_prefetch = 0 : i64, scratch_operands = 0 : i64, tpu.core_type = #tpu.core_type<tc>, window_params = [{transform_indices = @transform_0, window_bounds = array<i64: 1, 2, 8, 128>}, {transform_indices = @transform_1, window_bounds = array<i64: 1, 3, 8, 8>}, {transform_indices = @transform_2, window_bounds = array<i64: 1, 8, 1>}, {transform_indices = @transform_3, window_bounds = array<i64: 1, 2, 8, 128>}]} {
    %0 = tpu.iota {dimensions = array<i32: 1>} : vector<8x128xi32>
    %c0 = arith.constant 0 : index
    %c0_0 = arith.constant 0 : index
    %c0_1 = arith.constant 0 : index
    %1 = vector.load %arg4[%c0, %c0_0, %c0_1] : memref<1x8x1xf32, #tpu.memory_space<vmem>>, vector<1x8x1xf32>
    %2 = vector.shape_cast %1 : vector<1x8x1xf32> to vector<8x1xf32>
    %c0_2 = arith.constant 0 : index
    %c0_3 = arith.constant 0 : index
    %c0_4 = arith.constant 0 : index
    %c0_5 = arith.constant 0 : index
    %3 = vector.load %arg3[%c0_2, %c0_3, %c0_4, %c0_5] : memref<1x3x8x8xbf16, #tpu.memory_space<vmem>>, vector<1x1x8x8xbf16>
    %4 = vector.shape_cast %3 : vector<1x1x8x8xbf16> to vector<8x8xbf16>
    %c0_6 = arith.constant 0 : index
    %c1 = arith.constant 1 : index
    %c0_7 = arith.constant 0 : index
    %c0_8 = arith.constant 0 : index
    %5 = vector.load %arg3[%c0_6, %c1, %c0_7, %c0_8] : memref<1x3x8x8xbf16, #tpu.memory_space<vmem>>, vector<1x1x8x8xbf16>
    %6 = vector.shape_cast %5 : vector<1x1x8x8xbf16> to vector<8x8xbf16>
    %c0_9 = arith.constant 0 : index
    %c2 = arith.constant 2 : index
    %c0_10 = arith.constant 0 : index
    %c0_11 = arith.constant 0 : index
    %7 = vector.load %arg3[%c0_9, %c2, %c0_10, %c0_11] : memref<1x3x8x8xbf16, #tpu.memory_space<vmem>>, vector<1x1x8x8xbf16>
    %8 = vector.shape_cast %7 : vector<1x1x8x8xbf16> to vector<8x8xbf16>
    %c0_12 = arith.constant 0 : index
    %c0_13 = arith.constant 0 : index
    %c0_14 = arith.constant 0 : index
    %c0_15 = arith.constant 0 : index
    %9 = vector.load %arg2[%c0_12, %c0_13, %c0_14, %c0_15] : memref<1x2x8x128xbf16, #tpu.memory_space<vmem>>, vector<1x1x8x128xbf16>
    %10 = vector.shape_cast %9 : vector<1x1x8x128xbf16> to vector<8x128xbf16>
    %cst = arith.constant dense<0.000000e+00> : vector<8x128xf32>
    %11 = tpu.matmul %6, %10, %cst {dimension_numbers = #tpu.dot_dimension_numbers<[1], [0], [0], [1], [0, 0, 1, 1], [], []>} : vector<8x8xbf16>, vector<8x128xbf16>, vector<8x128xf32> -> vector<8x128xf32>
    %cst_16 = arith.constant dense<0.000000e+00> : vector<8x128xf32>
    %12 = tpu.matmul %4, %10, %cst_16 {dimension_numbers = #tpu.dot_dimension_numbers<[1], [0], [0], [1], [0, 0, 1, 1], [], []>} : vector<8x8xbf16>, vector<8x128xbf16>, vector<8x128xf32> -> vector<8x128xf32>
    %c0_i32 = arith.constant 0 : i32
    %13 = vector.broadcast %c0_i32 : i32 to vector<8x128xi32>
    %14 = arith.cmpi eq, %0, %13 : vector<8x128xi32>
    %c1_i32 = arith.constant 1 : i32
    %15 = tpu.dynamic_rotate %12 by %c1_i32 dim 1 : vector<8x128xf32>, i32 -> vector<8x128xf32>
    %cst_17 = arith.constant 0.000000e+00 : f32
    %16 = vector.broadcast %cst_17 : f32 to vector<8x128xf32>
    %17 = arith.select %14, %16, %15 : vector<8x128xi1>, vector<8x128xf32>
    %18 = arith.addf %11, %17 : vector<8x128xf32>
    %cst_18 = arith.constant dense<0.000000e+00> : vector<8x128xf32>
    %19 = tpu.matmul %8, %10, %cst_18 {dimension_numbers = #tpu.dot_dimension_numbers<[1], [0], [0], [1], [0, 0, 1, 1], [], []>} : vector<8x8xbf16>, vector<8x128xbf16>, vector<8x128xf32> -> vector<8x128xf32>
    %c127_i32 = arith.constant 127 : i32
    %20 = vector.broadcast %c127_i32 : i32 to vector<8x128xi32>
    %21 = arith.cmpi eq, %0, %20 : vector<8x128xi32>
    %c127_i32_19 = arith.constant 127 : i32
    %22 = tpu.dynamic_rotate %19 by %c127_i32_19 dim 1 : vector<8x128xf32>, i32 -> vector<8x128xf32>
    %cst_20 = arith.constant 0.000000e+00 : f32
    %23 = vector.broadcast %cst_20 : f32 to vector<8x128xf32>
    %24 = arith.select %21, %23, %22 : vector<8x128xi1>, vector<8x128xf32>
    %25 = arith.addf %18, %24 : vector<8x128xf32>
    %26 = vector.broadcast %2 : vector<8x1xf32> to vector<8x128xf32>
    %27 = arith.addf %25, %26 : vector<8x128xf32>
    %cst_21 = arith.constant 0.000000e+00 : f32
    %28 = vector.broadcast %cst_21 : f32 to vector<8x128xf32>
    %29 = arith.maximumf %27, %28 : vector<8x128xf32>
    %30 = arith.truncf %29 : vector<8x128xf32> to vector<8x128xbf16>
    %c0_22 = arith.constant 0 : index
    %c0_23 = arith.constant 0 : index
    %c0_24 = arith.constant 0 : index
    %c0_25 = arith.constant 0 : index
    %31 = vector.load %arg5[%c0_22, %c0_23, %c0_24, %c0_25] : memref<1x2x8x128xbf16, #tpu.memory_space<vmem>>, vector<1x1x8x128xbf16>
    %32 = vector.shape_cast %31 : vector<1x1x8x128xbf16> to vector<8x128xbf16>
    %33 = vector.shape_cast %30 : vector<8x128xbf16> to vector<1x1x8x128xbf16>
    tpu.vector_store %arg5[%c0_22, %c0_23, %c0_24, %c0_25], %33 {strides = array<i32>} : memref<1x2x8x128xbf16, #tpu.memory_space<vmem>>, vector<1x1x8x128xbf16>,
    %c0_26 = arith.constant 0 : index
    %c1_27 = arith.constant 1 : index
    %c0_28 = arith.constant 0 : index
    %c0_29 = arith.constant 0 : index
    %34 = vector.load %arg2[%c0_26, %c1_27, %c0_28, %c0_29] : memref<1x2x8x128xbf16, #tpu.memory_space<vmem>>, vector<1x1x8x128xbf16>
    %35 = vector.shape_cast %34 : vector<1x1x8x128xbf16> to vector<8x128xbf16>
    %cst_30 = arith.constant dense<0.000000e+00> : vector<8x128xf32>
    %36 = tpu.matmul %6, %35, %cst_30 {dimension_numbers = #tpu.dot_dimension_numbers<[1], [0], [0], [1], [0, 0, 1, 1], [], []>} : vector<8x8xbf16>, vector<8x128xbf16>, vector<8x128xf32> -> vector<8x128xf32>
    %cst_31 = arith.constant dense<0.000000e+00> : vector<8x128xf32>
    %37 = tpu.matmul %4, %35, %cst_31 {dimension_numbers = #tpu.dot_dimension_numbers<[1], [0], [0], [1], [0, 0, 1, 1], [], []>} : vector<8x8xbf16>, vector<8x128xbf16>, vector<8x128xf32> -> vector<8x128xf32>
    %c0_i32_32 = arith.constant 0 : i32
    %38 = vector.broadcast %c0_i32_32 : i32 to vector<8x128xi32>
    %39 = arith.cmpi eq, %0, %38 : vector<8x128xi32>
    %c1_i32_33 = arith.constant 1 : i32
    %40 = tpu.dynamic_rotate %37 by %c1_i32_33 dim 1 : vector<8x128xf32>, i32 -> vector<8x128xf32>
    %cst_34 = arith.constant 0.000000e+00 : f32
    %41 = vector.broadcast %cst_34 : f32 to vector<8x128xf32>
    %42 = arith.select %39, %41, %40 : vector<8x128xi1>, vector<8x128xf32>
    %43 = arith.addf %36, %42 : vector<8x128xf32>
    %cst_35 = arith.constant dense<0.000000e+00> : vector<8x128xf32>
    %44 = tpu.matmul %8, %35, %cst_35 {dimension_numbers = #tpu.dot_dimension_numbers<[1], [0], [0], [1], [0, 0, 1, 1], [], []>} : vector<8x8xbf16>, vector<8x128xbf16>, vector<8x128xf32> -> vector<8x128xf32>
    %c127_i32_36 = arith.constant 127 : i32
    %45 = vector.broadcast %c127_i32_36 : i32 to vector<8x128xi32>
    %46 = arith.cmpi eq, %0, %45 : vector<8x128xi32>
    %c127_i32_37 = arith.constant 127 : i32
    %47 = tpu.dynamic_rotate %44 by %c127_i32_37 dim 1 : vector<8x128xf32>, i32 -> vector<8x128xf32>
    %cst_38 = arith.constant 0.000000e+00 : f32
    %48 = vector.broadcast %cst_38 : f32 to vector<8x128xf32>
    %49 = arith.select %46, %48, %47 : vector<8x128xi1>, vector<8x128xf32>
    %50 = arith.addf %43, %49 : vector<8x128xf32>
    %51 = vector.broadcast %2 : vector<8x1xf32> to vector<8x128xf32>
    %52 = arith.addf %50, %51 : vector<8x128xf32>
    %cst_39 = arith.constant 0.000000e+00 : f32
    %53 = vector.broadcast %cst_39 : f32 to vector<8x128xf32>
    %54 = arith.maximumf %52, %53 : vector<8x128xf32>
    %55 = arith.truncf %54 : vector<8x128xf32> to vector<8x128xbf16>
    %c0_40 = arith.constant 0 : index
    %c1_41 = arith.constant 1 : index
    %c0_42 = arith.constant 0 : index
    %c0_43 = arith.constant 0 : index
    %56 = vector.load %arg5[%c0_40, %c1_41, %c0_42, %c0_43] : memref<1x2x8x128xbf16, #tpu.memory_space<vmem>>, vector<1x1x8x128xbf16>
    %57 = vector.shape_cast %56 : vector<1x1x8x128xbf16> to vector<8x128xbf16>
    %58 = vector.shape_cast %55 : vector<8x128xbf16> to vector<1x1x8x128xbf16>
    tpu.vector_store %arg5[%c0_40, %c1_41, %c0_42, %c0_43], %58 {strides = array<i32>} : memref<1x2x8x128xbf16, #tpu.memory_space<vmem>>, vector<1x1x8x128xbf16>,
    return
  }
  func.func @transform_0(%arg0: i32, %arg1: i32) -> (i32, i32, i32, i32) {
    %c0_i32 = arith.constant 0 : i32
    %c0_i32_0 = arith.constant 0 : i32
    %c0_i32_1 = arith.constant 0 : i32
    return %arg0, %arg1, %c0_i32, %c0_i32_0 : i32, i32, i32, i32
  }
  func.func @transform_1(%arg0: i32, %arg1: i32) -> (i32, i32, i32, i32) {
    %c0_i32 = arith.constant 0 : i32
    %c0_i32_0 = arith.constant 0 : i32
    %c0_i32_1 = arith.constant 0 : i32
    %c0_i32_2 = arith.constant 0 : i32
    return %arg0, %c0_i32, %c0_i32_0, %c0_i32_1 : i32, i32, i32, i32
  }
  func.func @transform_2(%arg0: i32, %arg1: i32) -> (i32, i32, i32) {
    %c0_i32 = arith.constant 0 : i32
    %c0_i32_0 = arith.constant 0 : i32
    %c0_i32_1 = arith.constant 0 : i32
    return %arg0, %c0_i32, %c0_i32_0 : i32, i32, i32
  }
  func.func @transform_3(%arg0: i32, %arg1: i32) -> (i32, i32, i32, i32) {
    %c0_i32 = arith.constant 0 : i32
    %c0_i32_0 = arith.constant 0 : i32
    %c0_i32_1 = arith.constant 0 : i32
    return %arg0, %arg1, %c0_i32, %c0_i32_0 : i32, i32, i32, i32
  }
}

</mosaic_0001>

<llo_original>
// kernel: tpu_custom_call.1
$region0: #{tpu_custom_call.1}
  #allocation0 [shape = 'u32[]', space=smem, size = 0x4, offset = 0x4, fixed_abs, tag = 'smem constant byte address 0x4 - core index']
  #allocation1 [shape = 'u32[144,128]{1,0:T(1,128)}', space=vmem, size = 0x12000, scoped, tag = 'internal scratch']
  %s0 = inlined_call_operand.vmem [shape: bf16[3,2,8,128], index: 0, kind: input, shape index: {}]
  %s1 = inlined_call_operand.hbm [shape: bf16[3,3,8,8], index: 1, kind: input, shape index: {}]
  %s2 = inlined_call_operand.vmem [shape: f32[3,8,1], index: 2, kind: input, shape index: {}]
  %s3 = inlined_call_operand.hbm [shape: bf16[3,2,8,128], index: 3, kind: output, shape index: {}]
  %s4 = sld [smem:[#allocation0]]
  $region49: #{tpu_custom_call.1} parent=0
    _
  %s6 = ssub.s32 1, %s4
  %s7 = scalar_select 0, %s6, %s4
  $region1: #{tpu_custom_call.1} parent=0
    #allocation2 [shape = 'u8[12288]{0}', space=vmem, size = 0x3000, scoped, tag = 'input window, operand 1']
    #allocation3 [shape = 's32[2]{0}', space=sflag, size = 0x8, scoped, tag = 'scoped memory for tpu_custom_call.1']
    #allocation4 [shape = 's32[2]{0}', space=sflag, size = 0x8, scoped, tag = 'scoped memory for tpu_custom_call.1']
    #allocation5 [shape = 'u8[8192]{0}', space=vmem, size = 0x2000, scoped, tag = 'output window, operand 0']
    %8 = vsyncpa [#allocation3], 0
    %s9 = scalar_lea.sflag [#allocation3], 1
    %10 = vsyncpa %s9, 0
    %11 = vsyncpa [#allocation4], 0
    %s12 = scalar_lea.sflag [#allocation4], 1
    %13 = vsyncpa %s12, 0
    loop: start=0, step=1, limit=5
    $region2: #{tpu_custom_call.1} parent=1 // loop_pre_header
      _
    $region3: #{tpu_custom_call.1} parent=1 // loop_header
      %s15 = sphi 0, %s19
      %p16 = scmp.ge.s32.totalorder %s15, 5
      %s22 = sphi 0, %s34
      %s23 = sphi 0, %s30
      %s24 = sphi 0, %s22
      %s25 = sphi 0, %s23
      %s26 = sphi 0, %s24
      %s27 = sphi 0, %s25
      %s39 = sphi 0, %s41
      %s42 = sphi 0, %s39
      %s43 = sphi 0, %s42
      %s59 = sphi 0, %s43
      %s65 = sphi 0, %s67
      %s68 = sphi 0, %s65
      %s69 = sphi 0, %s68
      %s85 = sphi 0, %s69
      %s91 = sphi 0, %s93
      %s94 = sphi 0, %s91
      %s95 = sphi 0, %s94
      %s111 = sphi 0, %s95
      %s119 = sphi 0, %s121
      %s122 = sphi 0, %s119
      %s123 = sphi 0, %s122
      %s139 = sphi 0, %s123
    $region4: #{tpu_custom_call.1} parent=1 // loop_header_branch
      %18 = sbr.rel (%p16) target = $region8
    $region5: #{tpu_custom_call.1} parent=1 // loop_body
      %s20 = ssub.s32 %s15, 1
      %s21 = ssub.s32 %s15, 2
      %s28 = sadd.s32 1, %s23
      %p29 = scmp.ge.s32.totalorder %s28, 1
      %s30 = scalar_select %p29, 0, %s28
      %s31 = sadd.s32 1, %s22
      %s32 = scalar_select %p29, %s31, %s22
      %p33 = scmp.ge.s32.totalorder %s32, 3
      %s34 = scalar_select %p33, 0, %s32
      %s35 = ssub.s32 %s22, %s34
      %s36 = ssub.s32 %s23, %s30
      %s37 = sor.u32 %s35, %s36
      %p38 = scmp.eq.s32.totalorder %s37, 0
      %s40 = sadd.s32 %s39, 1
      %s41 = scalar_select %p38, %s39, %s40
      %p44 = pneg %p38
      %p45 = scmp.eq.s32.totalorder %s15, 2
      %p46 = por %p44, %p45
      %p47 = scmp.ne.s32.totalorder %s39, %s42
      %p48 = scmp.eq.s32.totalorder %s15, 0
      %p49 = por %p47, %p48
      %p50 = scmp.ne.s32.totalorder %s39, %s42
      %p51 = scmp.eq.s32.totalorder %s20, 2
      %p52 = por %p50, %p51
      %p53 = scmp.ne.s32.totalorder %s42, %s43
      %p54 = scmp.eq.s32.totalorder %s20, 0
      %p55 = por %p53, %p54
      %p56 = scmp.ne.s32.totalorder %s42, %s43
      %p57 = scmp.eq.s32.totalorder %s21, 2
      %p58 = por %p56, %p57
      %p60 = scmp.ne.s32.totalorder %s43, %s59
      %p61 = scmp.eq.s32.totalorder %s21, 0
      %p62 = por %p60, %p61
      %s63 = ssub.s32 %s22, %s34
      %p64 = scmp.eq.s32.totalorder %s63, 0
      %s66 = sadd.s32 %s65, 1
      %s67 = scalar_select %p64, %s65, %s66
      %p70 = pneg %p64
      %p71 = scmp.eq.s32.totalorder %s15, 2
      %p72 = por %p70, %p71
      %p73 = scmp.ne.s32.totalorder %s65, %s68
      %p74 = scmp.eq.s32.totalorder %s15, 0
      %p75 = por %p73, %p74
      %p76 = scmp.ne.s32.totalorder %s65, %s68
      %p77 = scmp.eq.s32.totalorder %s20, 2
      %p78 = por %p76, %p77
      %p79 = scmp.ne.s32.totalorder %s68, %s69
      %p80 = scmp.eq.s32.totalorder %s20, 0
      %p81 = por %p79, %p80
      %p82 = scmp.ne.s32.totalorder %s68, %s69
      %p83 = scmp.eq.s32.totalorder %s21, 2
      %p84 = por %p82, %p83
      %p86 = scmp.ne.s32.totalorder %s69, %s85
      %p87 = scmp.eq.s32.totalorder %s21, 0
      %p88 = por %p86, %p87
      %s89 = ssub.s32 %s22, %s34
      %p90 = scmp.eq.s32.totalorder %s89, 0
      %s92 = sadd.s32 %s91, 1
      %s93 = scalar_select %p90, %s91, %s92
      %p96 = pneg %p90
      %p97 = scmp.eq.s32.totalorder %s15, 2
      %p98 = por %p96, %p97
      %p99 = scmp.ne.s32.totalorder %s91, %s94
      %p100 = scmp.eq.s32.totalorder %s15, 0
      %p101 = por %p99, %p100
      %p102 = scmp.ne.s32.totalorder %s91, %s94
      %p103 = scmp.eq.s32.totalorder %s20, 2
      %p104 = por %p102, %p103
      %p105 = scmp.ne.s32.totalorder %s94, %s95
      %p106 = scmp.eq.s32.totalorder %s20, 0
      %p107 = por %p105, %p106
      %p108 = scmp.ne.s32.totalorder %s94, %s95
      %p109 = scmp.eq.s32.totalorder %s21, 2
      %p110 = por %p108, %p109
      %p112 = scmp.ne.s32.totalorder %s95, %s111
      %p113 = scmp.eq.s32.totalorder %s21, 0
      %p114 = por %p112, %p113
      %s115 = ssub.s32 %s22, %s34
      %s116 = ssub.s32 %s23, %s30
      %s117 = sor.u32 %s115, %s116
      %p118 = scmp.eq.s32.totalorder %s117, 0
      %s120 = sadd.s32 %s119, 1
      %s121 = scalar_select %p118, %s119, %s120
      %p124 = pneg %p118
      %p125 = scmp.eq.s32.totalorder %s15, 2
      %p126 = por %p124, %p125
      %p127 = scmp.ne.s32.totalorder %s119, %s122
      %p128 = scmp.eq.s32.totalorder %s15, 0
      %p129 = por %p127, %p128
      %p130 = scmp.ne.s32.totalorder %s119, %s122
      %p131 = scmp.eq.s32.totalorder %s20, 2
      %p132 = por %p130, %p131
      %p133 = scmp.ne.s32.totalorder %s122, %s123
      %p134 = scmp.eq.s32.totalorder %s20, 0
      %p135 = por %p133, %p134
      %p136 = scmp.ne.s32.totalorder %s122, %s123
      %p137 = scmp.eq.s32.totalorder %s21, 2
      %p138 = por %p136, %p137
      %p140 = scmp.ne.s32.totalorder %s123, %s139
      %p141 = scmp.eq.s32.totalorder %s21, 0
      %p142 = por %p140, %p141
      %p143 = scmp.le.s32.totalorder 1, %s15
      %p144 = scmp.lt.s32.totalorder %s15, 4
      %p145 = pnand %p143, %p144
      %p146 = pneg %p145
      // Predicated region
      $region9: #{tpu_custom_call.1} parent=5 // pred_check
        _
      $region10: #{tpu_custom_call.1} parent=5 // pred_check_branch
        %148 = sbr.rel (%p145) target = $region12
      $region11: #{tpu_custom_call.1} parent=5 // pred_region
        %s149 = ssub.s32 %s15, 1
      $region12: #{tpu_custom_call.1} parent=5 // pred_fallthru
        _
      %p150 = scmp.lt.s32.totalorder %s15, 3
      // Predicated region
      $region13: #{tpu_custom_call.1} parent=5 // pred_check
        %p151 = pneg %p150
      $region14: #{tpu_custom_call.1} parent=5 // pred_check_branch
        %153 = sbr.rel (%p151) target = $region16
      $region15: #{tpu_custom_call.1} parent=5 // pred_region
        // Predicated region
        $region17: #{tpu_custom_call.1} parent=15 // pred_check
          %p154 = pneg %p49
        $region18: #{tpu_custom_call.1} parent=15 // pred_check_branch
          %156 = sbr.rel (%p154) target = $region20
        $region19: #{tpu_custom_call.1} parent=15 // pred_region
          %s157 = smul.u32 2, %s23
          %p158 = scmp.lt.s32.totalorder %s22, 2
          %s159 = scalar_select %p158, %s22, 2
          %p160 = scmp.lt.s32.totalorder %s157, 1
          %s161 = scalar_select %p160, %s157, 1
          %s162 = smul.addr %s159, 2
          %s163 = sadd.s32 %s161, %s162
          %s164 = smul.addr %s163, 4
          %s165 = scalar_lea.vmem %s0, %s164
          %s166 = smul.u32 2, %s23
        $region20: #{tpu_custom_call.1} parent=15 // pred_fallthru
          _
        // Predicated region
        $region21: #{tpu_custom_call.1} parent=15 // pred_check
          %p167 = pneg %p75
        $region22: #{tpu_custom_call.1} parent=15 // pred_check_branch
          %169 = sbr.rel (%p167) target = $region24
        $region23: #{tpu_custom_call.1} parent=15 // pred_region
          %s170 = sand.u32 %s65, 1
          %s171 = scalar_lea.sflag [#allocation3], %s170
          %s172 = sand.u32 %s65, 1
          %s173 = smul.addr %s172, 12
          %s174 = scalar_lea.vmem [#allocation2], %s173
          %s176 = ssub.s32 192, 192
          %177 = vsyncadd %s171, %s176
          %s178 = smul.addr %s22, 3
          %s179 = smul.addr %s178, 64
          %s180 = scalar_lea.hbm %s1, %s179
          %s181 = sshll.u32 %s174, 4
          %s182 = int_to_ptr.vmem [resolvable:$true] %s181
          %187 = dma.hbm_to_vmem [thread:$0]  %s180, 192, %s182, %s171, 64, 64, 4
        $region24: #{tpu_custom_call.1} parent=15 // pred_fallthru
          _
        // Predicated region
        $region25: #{tpu_custom_call.1} parent=15 // pred_check
          %p188 = pneg %p101
        $region26: #{tpu_custom_call.1} parent=15 // pred_check_branch
          %190 = sbr.rel (%p188) target = $region28
        $region27: #{tpu_custom_call.1} parent=15 // pred_region
          %p191 = scmp.lt.s32.totalorder %s22, 2
          %s192 = scalar_select %p191, %s22, 2
          %s193 = smul.addr %s192, 8
          %s194 = scalar_lea.vmem %s2, %s193
        $region28: #{tpu_custom_call.1} parent=15 // pred_fallthru
          _
      $region16: #{tpu_custom_call.1} parent=5 // pred_fallthru
        _
      %p195 = scmp.le.s32.totalorder 1, %s15
      %p196 = scmp.lt.s32.totalorder %s15, 4
      %p197 = pnand %p195, %p196
      %p198 = pneg %p197
      // Predicated region
      $region29: #{tpu_custom_call.1} parent=5 // pred_check
        _
      $region30: #{tpu_custom_call.1} parent=5 // pred_check_branch
        %200 = sbr.rel (%p197) target = $region32
      $region31: #{tpu_custom_call.1} parent=5 // pred_region
        %s201 = ssub.s32 %s15, 1
        %s202 = sand.u32 %s68, 1
        %s203 = scalar_lea.sflag [#allocation3], %s202
        %s204 = sand.u32 %s68, 1
        %s205 = smul.addr %s204, 12
        %s206 = scalar_lea.vmem [#allocation2], %s205
        // Predicated region
        $region33: #{tpu_custom_call.1} parent=31 // pred_check
          %p207 = pneg %p81
        $region34: #{tpu_custom_call.1} parent=31 // pred_check_branch
          %209 = sbr.rel (%p207) target = $region36
        $region35: #{tpu_custom_call.1} parent=31 // pred_region
          %210 = dma.done %s203, 192
        $region36: #{tpu_custom_call.1} parent=31 // pred_fallthru
          _
        %s211 = smul.u32 2, %s25
        %p212 = scmp.lt.s32.totalorder %s24, 2
        %s213 = scalar_select %p212, %s24, 2
        %p214 = scmp.lt.s32.totalorder %s211, 1
        %s215 = scalar_select %p214, %s211, 1
        %s216 = smul.addr %s213, 2
        %s217 = sadd.s32 %s215, %s216
        %s218 = smul.addr %s217, 4
        %s219 = scalar_lea.vmem %s0, %s218
        %p220 = pneg %p55
        %p221 = pneg %p52
        %s222 = sand.u32 %s68, 1
        %s223 = scalar_lea.sflag [#allocation3], %s222
        %s224 = sand.u32 %s68, 1
        %s225 = smul.addr %s224, 12
        %s226 = scalar_lea.vmem [#allocation2], %s225
        %p227 = pneg %p81
        %p228 = pneg %p78
        %p229 = scmp.lt.s32.totalorder %s24, 2
        %s230 = scalar_select %p229, %s24, 2
        %s231 = smul.addr %s230, 8
        %s232 = scalar_lea.vmem %s2, %s231
        %p233 = pneg %p107
        %p234 = pneg %p104
        %p235 = pneg %p135
        %p236 = pneg %p132
        %s237 = sand.u32 %s122, 1
        %s238 = scalar_lea.sflag [#allocation4], %s237
        %s239 = sand.u32 %s122, 1
        %s240 = smul.addr %s239, 8
        %s241 = scalar_lea.vmem [#allocation5], %s240
        %s242 = smul.u32 2, %s25
        %p243 = scmp.lt.s32.totalorder %s24, 2
        %s244 = scalar_select %p243, %s24, 2
        %p245 = scmp.lt.s32.totalorder %s242, 1
        %s246 = scalar_select %p245, %s242, 1
        %s247 = smul.addr %s244, 2
        %s248 = sadd.s32 %s246, %s247
        %s249 = smul.addr %s248, 4
        %s250 = scalar_lea.vmem %s0, %s249
        %s251 = smul.u32 2, %s25
        %p252 = scmp.lt.s32.totalorder %s24, 2
        %s253 = scalar_select %p252, %s24, 2
        %s254 = smul.addr %s253, 8
        %s255 = scalar_lea.vmem %s2, %s254
        %s256 = smul.u32 2, %s25
        %v258 = vlaneseq
        %v259 = vand.u32 %v258, 127
        %v260 = vld [vmem:[%s255] sm:$0xff]
        %v261 = vld [vmem:[%s206] sm:$0xf]
        %s262 = scalar_lea.vmem %s206, 4 [#allocation2]
        %v263 = vld [vmem:[%s262] sm:$0xf]
        %s264 = scalar_lea.vmem %s206, 8 [#allocation2]
        %v265 = vld [vmem:[%s264] sm:$0xf]
        %v266 = vld [vmem:[%s250] sm:$0xf]
        %vm267 = vcmask 64512
        %v269 = vsel %vm267, %v261, 0
        %vm271 = vcmask 1043456
        %v273 = vsel %vm271, %v266, 0
        %275 = vmatprep.subr.bf16.mxu0 0
        %276 = vmatpush1.bf16.msra.mxu0 0
        %277 = vmatprep.subr.bf16.mxu0 0
        %278 = vmatpush1.bf16.msra.mxu0 0
        %279 = vmatprep.subr.bf16.mxu0 0
        %280 = vmatpush1.bf16.msra.mxu0 0
        %281 = vmatprep.subr.bf16.mxu0 0
        %282 = vmatpush1.bf16.msra.mxu0 0
        %283 = vmatprep.subr.bf16.mxu0 0
        %284 = vmatpush1.bf16.msra.mxu0 0
        %285 = vmatprep.subr.bf16.mxu0 0
        %286 = vmatpush1.bf16.msra.mxu0 0
        %287 = vmatprep.subr.bf16.mxu0 0
        %288 = vmatpush1.bf16.msra.mxu0 0
        %289 = vmatprep.subr.bf16.mxu0 0
        %290 = vmatpush1.bf16.msra.mxu0 %v273
        %291 = vmatprep.subr.bf16.mxu0 0
        %292 = vmatpush2.bf16.msra.mxu0 0
        %293 = vmatprep.subr.bf16.mxu0 0
        %294 = vmatpush2.bf16.msra.mxu0 0
        %295 = vmatprep.subr.bf16.mxu0 0
        %296 = vmatpush2.bf16.msra.mxu0 0
        %297 = vmatprep.subr.bf16.mxu0 0
        %298 = vmatpush2.bf16.msra.mxu0 0
        %299 = vmatprep.subr.bf16.mxu0 0
        %300 = vmatpush2.bf16.msra.mxu0 0
        %301 = vmatprep.subr.bf16.mxu0 0
        %302 = vmatpush2.bf16.msra.mxu0 0
        %303 = vmatprep.subr.bf16.mxu0 0
        %304 = vmatpush2.bf16.msra.mxu0 0
        %305 = vmatprep.subr.bf16.mxu0 0
        %306 = vmatpush2.bf16.msra.mxu0 0
        %307 = vmatprep.mubr.bf16.mxu0 0
        %308 = vmatmul.mubr.bf16.gmra.mxu0 %v269
        %v309 = vpop.f32.mrf.mxu0
        %v310 = vadd.f32 0.0, %v309
        %v311 = vpop.f32.mrf.mxu0
        %v312 = vpop.f32.mrf.mxu0
        %v313 = vpop.f32.mrf.mxu0
        %314 = vdwg.mxu0
        %vm315 = vcmp.eq.s32.totalorder %v259, 0
        %316 = vrot.lane.b32.xlu0 %v310, 1
        %v317 = vpop.permute.xlu0 %316
        %v318 = vsel %vm315, 0.0, %v317
        %v320 = vsel %vm267, %v263, 0
        %322 = vmatprep.subr.bf16.mxu0 0
        %323 = vmatpush1.bf16.msra.mxu0 0
        %324 = vmatprep.subr.bf16.mxu0 0
        %325 = vmatpush1.bf16.msra.mxu0 0
        %326 = vmatprep.subr.bf16.mxu0 0
        %327 = vmatpush1.bf16.msra.mxu0 0
        %328 = vmatprep.subr.bf16.mxu0 0
        %329 = vmatpush1.bf16.msra.mxu0 0
        %330 = vmatprep.subr.bf16.mxu0 0
        %331 = vmatpush1.bf16.msra.mxu0 0
        %332 = vmatprep.subr.bf16.mxu0 0
        %333 = vmatpush1.bf16.msra.mxu0 0
        %334 = vmatprep.subr.bf16.mxu0 0
        %335 = vmatpush1.bf16.msra.mxu0 0
        %336 = vmatprep.subr.bf16.mxu0 0
        %337 = vmatpush1.bf16.msra.mxu0 %v273
        %338 = vmatprep.subr.bf16.mxu0 0
        %339 = vmatpush2.bf16.msra.mxu0 0
        %340 = vmatprep.subr.bf16.mxu0 0
        %341 = vmatpush2.bf16.msra.mxu0 0
        %342 = vmatprep.subr.bf16.mxu0 0
        %343 = vmatpush2.bf16.msra.mxu0 0
        %344 = vmatprep.subr.bf16.mxu0 0
        %345 = vmatpush2.bf16.msra.mxu0 0
        %346 = vmatprep.subr.bf16.mxu0 0
        %347 = vmatpush2.bf16.msra.mxu0 0
        %348 = vmatprep.subr.bf16.mxu0 0
        %349 = vmatpush2.bf16.msra.mxu0 0
        %350 = vmatprep.subr.bf16.mxu0 0
        %351 = vmatpush2.bf16.msra.mxu0 0
        %352 = vmatprep.subr.bf16.mxu0 0
        %353 = vmatpush2.bf16.msra.mxu0 0
        %354 = vmatprep.mubr.bf16.mxu0 0
        %355 = vmatmul.mubr.bf16.gmra.mxu0 %v320
        %v356 = vpop.f32.mrf.mxu0
        %v357 = vadd.f32 %v318, %v356
        %v358 = vpop.f32.mrf.mxu0
        %v359 = vpop.f32.mrf.mxu0
        %v360 = vpop.f32.mrf.mxu0
        %361 = vdwg.mxu0
        %v363 = vsel %vm267, %v265, 0
        %365 = vmatprep.subr.bf16.mxu0 0
        %366 = vmatpush1.bf16.msra.mxu0 0
        %367 = vmatprep.subr.bf16.mxu0 0
        %368 = vmatpush1.bf16.msra.mxu0 0
        %369 = vmatprep.subr.bf16.mxu0 0
        %370 = vmatpush1.bf16.msra.mxu0 0
        %371 = vmatprep.subr.bf16.mxu0 0
        %372 = vmatpush1.bf16.msra.mxu0 0
        %373 = vmatprep.subr.bf16.mxu0 0
        %374 = vmatpush1.bf16.msra.mxu0 0
        %375 = vmatprep.subr.bf16.mxu0 0
        %376 = vmatpush1.bf16.msra.mxu0 0
        %377 = vmatprep.subr.bf16.mxu0 0
        %378 = vmatpush1.bf16.msra.mxu0 0
        %379 = vmatprep.subr.bf16.mxu0 0
        %380 = vmatpush1.bf16.msra.mxu0 %v273
        %381 = vmatprep.subr.bf16.mxu0 0
        %382 = vmatpush2.bf16.msra.mxu0 0
        %383 = vmatprep.subr.bf16.mxu0 0
        %384 = vmatpush2.bf16.msra.mxu0 0
        %385 = vmatprep.subr.bf16.mxu0 0
        %386 = vmatpush2.bf16.msra.mxu0 0
        %387 = vmatprep.subr.bf16.mxu0 0
        %388 = vmatpush2.bf16.msra.mxu0 0
        %389 = vmatprep.subr.bf16.mxu0 0
        %390 = vmatpush2.bf16.msra.mxu0 0
        %391 = vmatprep.subr.bf16.mxu0 0
        %392 = vmatpush2.bf16.msra.mxu0 0
        %393 = vmatprep.subr.bf16.mxu0 0
        %394 = vmatpush2.bf16.msra.mxu0 0
        %395 = vmatprep.subr.bf16.mxu0 0
        %396 = vmatpush2.bf16.msra.mxu0 0
        %397 = vmatprep.mubr.bf16.mxu0 0
        %398 = vmatmul.mubr.bf16.gmra.mxu0 %v363
        %v399 = vpop.f32.mrf.mxu0
        %v400 = vadd.f32 0.0, %v399
        %v401 = vpop.f32.mrf.mxu0
        %v402 = vpop.f32.mrf.mxu0
        %v403 = vpop.f32.mrf.mxu0
        %404 = vdwg.mxu0
        %vm405 = vcmp.eq.s32.totalorder %v259, 127
        %406 = vrot.lane.b32.xlu0 %v400, 127
        %v407 = vpop.permute.xlu0 %406
        %v408 = vsel %vm405, 0.0, %v407
        %v409 = vadd.f32 %v357, %v408
        %411 = vset.pattern.permute.xlu0 0
        %412 = vperm.xlu0 %411, %v260
        %v413 = vpop.permute.xlu0 %412
        %v415 = vadd.f32 %v409, %v413
        %v416 = vmax.f32 %v415, 0.0
        %v417 = vpack.c.bf16 %v416, %v416
        %418 = vst [vmem:[%s241] sm:$0xf] %v417
        %s419 = scalar_lea.vmem %s250, 4
        %v420 = vld [vmem:[%s419] sm:$0xf]
        %v422 = vsel %vm271, %v420, 0
        %424 = vmatprep.subr.bf16.mxu0 0
        %425 = vmatpush1.bf16.msra.mxu0 0
        %426 = vmatprep.subr.bf16.mxu0 0
        %427 = vmatpush1.bf16.msra.mxu0 0
        %428 = vmatprep.subr.bf16.mxu0 0
        %429 = vmatpush1.bf16.msra.mxu0 0
        %430 = vmatprep.subr.bf16.mxu0 0
        %431 = vmatpush1.bf16.msra.mxu0 0
        %432 = vmatprep.subr.bf16.mxu0 0
        %433 = vmatpush1.bf16.msra.mxu0 0
        %434 = vmatprep.subr.bf16.mxu0 0
        %435 = vmatpush1.bf16.msra.mxu0 0
        %436 = vmatprep.subr.bf16.mxu0 0
        %437 = vmatpush1.bf16.msra.mxu0 0
        %438 = vmatprep.subr.bf16.mxu0 0
        %439 = vmatpush1.bf16.msra.mxu0 %v422
        %440 = vmatprep.subr.bf16.mxu0 0
        %441 = vmatpush2.bf16.msra.mxu0 0
        %442 = vmatprep.subr.bf16.mxu0 0
        %443 = vmatpush2.bf16.msra.mxu0 0
        %444 = vmatprep.subr.bf16.mxu0 0
        %445 = vmatpush2.bf16.msra.mxu0 0
        %446 = vmatprep.subr.bf16.mxu0 0
        %447 = vmatpush2.bf16.msra.mxu0 0
        %448 = vmatprep.subr.bf16.mxu0 0
        %449 = vmatpush2.bf16.msra.mxu0 0
        %450 = vmatprep.subr.bf16.mxu0 0
        %451 = vmatpush2.bf16.msra.mxu0 0
        %452 = vmatprep.subr.bf16.mxu0 0
        %453 = vmatpush2.bf16.msra.mxu0 0
        %454 = vmatprep.subr.bf16.mxu0 0
        %455 = vmatpush2.bf16.msra.mxu0 0
        %456 = vmatprep.mubr.bf16.mxu0 0
        %457 = vmatmul.mubr.bf16.gmra.mxu0 %v269
        %v458 = vpop.f32.mrf.mxu0
        %v459 = vadd.f32 0.0, %v458
        %v460 = vpop.f32.mrf.mxu0
        %v461 = vpop.f32.mrf.mxu0
        %v462 = vpop.f32.mrf.mxu0
        %463 = vdwg.mxu0
        %464 = vrot.lane.b32.xlu0 %v459, 1
        %v465 = vpop.permute.xlu0 %464
        %v466 = vsel %vm315, 0.0, %v465
        %467 = vmatprep.subr.bf16.mxu0 0
        %468 = vmatpush1.bf16.msra.mxu0 0
        %469 = vmatprep.subr.bf16.mxu0 0
        %470 = vmatpush1.bf16.msra.mxu0 0
        %471 = vmatprep.subr.bf16.mxu0 0
        %472 = vmatpush1.bf16.msra.mxu0 0
        %473 = vmatprep.subr.bf16.mxu0 0
        %474 = vmatpush1.bf16.msra.mxu0 0
        %475 = vmatprep.subr.bf16.mxu0 0
        %476 = vmatpush1.bf16.msra.mxu0 0
        %477 = vmatprep.subr.bf16.mxu0 0
        %478 = vmatpush1.bf16.msra.mxu0 0
        %479 = vmatprep.subr.bf16.mxu0 0
        %480 = vmatpush1.bf16.msra.mxu0 0
        %481 = vmatprep.subr.bf16.mxu0 0
        %482 = vmatpush1.bf16.msra.mxu0 %v422
        %483 = vmatprep.subr.bf16.mxu0 0
        %484 = vmatpush2.bf16.msra.mxu0 0
        %485 = vmatprep.subr.bf16.mxu0 0
        %486 = vmatpush2.bf16.msra.mxu0 0
        %487 = vmatprep.subr.bf16.mxu0 0
        %488 = vmatpush2.bf16.msra.mxu0 0
        %489 = vmatprep.subr.bf16.mxu0 0
        %490 = vmatpush2.bf16.msra.mxu0 0
        %491 = vmatprep.subr.bf16.mxu0 0
        %492 = vmatpush2.bf16.msra.mxu0 0
        %493 = vmatprep.subr.bf16.mxu0 0
        %494 = vmatpush2.bf16.msra.mxu0 0
        %495 = vmatprep.subr.bf16.mxu0 0
        %496 = vmatpush2.bf16.msra.mxu0 0
        %497 = vmatprep.subr.bf16.mxu0 0
        %498 = vmatpush2.bf16.msra.mxu0 0
        %499 = vmatprep.mubr.bf16.mxu0 0
        %500 = vmatmul.mubr.bf16.gmra.mxu0 %v320
        %v501 = vpop.f32.mrf.mxu0
        %v502 = vadd.f32 %v466, %v501
        %v503 = vpop.f32.mrf.mxu0
        %v504 = vpop.f32.mrf.mxu0
        %v505 = vpop.f32.mrf.mxu0
        %506 = vdwg.mxu0
        %507 = vmatprep.subr.bf16.mxu0 0
        %508 = vmatpush1.bf16.msra.mxu0 0
        %509 = vmatprep.subr.bf16.mxu0 0
        %510 = vmatpush1.bf16.msra.mxu0 0
        %511 = vmatprep.subr.bf16.mxu0 0
        %512 = vmatpush1.bf16.msra.mxu0 0
        %513 = vmatprep.subr.bf16.mxu0 0
        %514 = vmatpush1.bf16.msra.mxu0 0
        %515 = vmatprep.subr.bf16.mxu0 0
        %516 = vmatpush1.bf16.msra.mxu0 0
        %517 = vmatprep.subr.bf16.mxu0 0
        %518 = vmatpush1.bf16.msra.mxu0 0
        %519 = vmatprep.subr.bf16.mxu0 0
        %520 = vmatpush1.bf16.msra.mxu0 0
        %521 = vmatprep.subr.bf16.mxu0 0
        %522 = vmatpush1.bf16.msra.mxu0 %v422
        %523 = vmatprep.subr.bf16.mxu0 0
        %524 = vmatpush2.bf16.msra.mxu0 0
        %525 = vmatprep.subr.bf16.mxu0 0
        %526 = vmatpush2.bf16.msra.mxu0 0
        %527 = vmatprep.subr.bf16.mxu0 0
        %528 = vmatpush2.bf16.msra.mxu0 0
        %529 = vmatprep.subr.bf16.mxu0 0
        %530 = vmatpush2.bf16.msra.mxu0 0
        %531 = vmatprep.subr.bf16.mxu0 0
        %532 = vmatpush2.bf16.msra.mxu0 0
        %533 = vmatprep.subr.bf16.mxu0 0
        %534 = vmatpush2.bf16.msra.mxu0 0
        %535 = vmatprep.subr.bf16.mxu0 0
        %536 = vmatpush2.bf16.msra.mxu0 0
        %537 = vmatprep.subr.bf16.mxu0 0
        %538 = vmatpush2.bf16.msra.mxu0 0
        %539 = vmatprep.mubr.bf16.mxu0 0
        %540 = vmatmul.mubr.bf16.gmra.mxu0 %v363
        %v541 = vpop.f32.mrf.mxu0
        %v542 = vadd.f32 0.0, %v541
        %v543 = vpop.f32.mrf.mxu0
        %v544 = vpop.f32.mrf.mxu0
        %v545 = vpop.f32.mrf.mxu0
        %546 = vdwg.mxu0
        %547 = vrot.lane.b32.xlu0 %v542, 127
        %v548 = vpop.permute.xlu0 %547
        %v549 = vsel %vm405, 0.0, %v548
        %v550 = vadd.f32 %v502, %v549
        %v551 = vadd.f32 %v550, %v413
        %v552 = vmax.f32 %v551, 0.0
        %v553 = vpack.c.bf16 %v552, %v552
        %s554 = scalar_lea.vmem %s241, 4 [#allocation5]
        %555 = vst [vmem:[%s554] sm:$0xf] %v553
        %s556 = sand.u32 %s122, 1
        %s557 = scalar_lea.sflag [#allocation4], %s556
        %s558 = sand.u32 %s122, 1
        %s559 = smul.addr %s558, 8
        %s560 = scalar_lea.vmem [#allocation5], %s559
        // Predicated region
        $region37: #{tpu_custom_call.1} parent=31 // pred_check
          %p561 = pneg %p132
        $region38: #{tpu_custom_call.1} parent=31 // pred_check_branch
          %563 = sbr.rel (%p561) target = $region40
        $region39: #{tpu_custom_call.1} parent=31 // pred_region
          %s564 = smul.u32 2, %s25
          %s566 = ssub.s32 128, 128
          %567 = vsyncadd %s557, %s566
          %s568 = smul.addr %s24, 2
          %s569 = sadd.s32 %s564, %s568
          %s570 = smul.addr %s569, 64
          %s571 = scalar_lea.hbm %s3, %s570
          %s572 = sshll.u32 %s560, 4
          %s573 = int_to_ptr.vmem [resolvable:$true] %s572
          %578 = dma.vmem_to_hbm [thread:$0]  %s573, 128, %s571, %s557, 64, 64, 4
        $region40: #{tpu_custom_call.1} parent=31 // pred_fallthru
          _
      $region32: #{tpu_custom_call.1} parent=5 // pred_fallthru
        _
      %p579 = scmp.le.s32.totalorder 2, %s15
      // Predicated region
      $region41: #{tpu_custom_call.1} parent=5 // pred_check
        %p580 = pneg %p579
      $region42: #{tpu_custom_call.1} parent=5 // pred_check_branch
        %582 = sbr.rel (%p580) target = $region44
      $region43: #{tpu_custom_call.1} parent=5 // pred_region
        %s583 = ssub.s32 %s15, 2
        // Predicated region
        $region45: #{tpu_custom_call.1} parent=43 // pred_check
          %p584 = pneg %p138
        $region46: #{tpu_custom_call.1} parent=43 // pred_check_branch
          %586 = sbr.rel (%p584) target = $region48
        $region47: #{tpu_custom_call.1} parent=43 // pred_region
          %s587 = sand.u32 %s123, 1
          %s588 = scalar_lea.sflag [#allocation4], %s587
          %s589 = sand.u32 %s123, 1
          %s590 = smul.addr %s589, 8
          %s591 = scalar_lea.vmem [#allocation5], %s590
          %592 = dma.done %s588, 128
        $region48: #{tpu_custom_call.1} parent=43 // pred_fallthru
          _
      $region44: #{tpu_custom_call.1} parent=5 // pred_fallthru
        _
    $region6: #{tpu_custom_call.1} parent=1 // loop_footer
      %s19 = sadd.s32 1, %s15
    $region7: #{tpu_custom_call.1} parent=1 // loop_footer_branch
      %14 = sbr.rel target = $region3
    $region8: #{tpu_custom_call.1} parent=1 // loop_exit
      _
    %593 = vsyncpa [#allocation3], 1
    %s594 = scalar_lea.sflag [#allocation3], 1
    %595 = vsyncpa %s594, 1
    %596 = vsyncpa [#allocation4], 1
    %s597 = scalar_lea.sflag [#allocation4], 1
    %598 = vsyncpa %s597, 1

</llo_original>
